<compile_context>
chip_gen: v5e
topology: v5e:2x2
jax: 0.10.0
libtpu: 0.0.40
codegen_flags: <defaults>
</compile_context>

<pallas_src>
import math

import jax
import jax.numpy as jnp
from jax.experimental import pallas as pl
from jax.experimental.pallas import tpu as pltpu


# ---------------------------------------------------------------------------
# Pallas kernel: one row-tile of  out = x @ W
# ---------------------------------------------------------------------------
def _tfe_kernel(x_ref, w_ref, o_ref):
    # x_ref: (TN, x_width)        row tile of (possibly row-folded) input
    # w_ref: (x_width, out_width) weight (input-major / block-diag), VMEM-resident
    # o_ref: (TN, out_width)
    o_ref[...] = jnp.dot(
        x_ref[...], w_ref[...], preferred_element_type=jnp.float32
    ).astype(o_ref.dtype)


def _round_up(n, m):
    return (n + m - 1) // m * m


def _choose_row_tile(n_rows, x_width, out_width, itemsize,
                     target_out_bytes=2 << 20,    # ~2 MiB output block
                     vmem_budget_bytes=12 << 20,  # double-buffered in+out working set
                     min_grid_steps=4):
    """Pick the row-tile size from a lane-padded per-row VMEM footprint."""
    lane = 128
    x_row = _round_up(x_width, lane) * itemsize     # last dim pads to 128 lanes in VMEM
    o_row = _round_up(out_width, lane) * itemsize
    per_row = 2 * (x_row + o_row)                   # x2: double buffering per ref
    tn_vmem = max(8, vmem_budget_bytes // per_row)
    tn_out = max(8, target_out_bytes // max(out_width * itemsize, 1))
    tn = min(tn_vmem, tn_out)
    # Keep >= min_grid_steps grid steps when N is large so both v7x TCs stay busy.
    tn = min(tn, max(8, _round_up(pl.cdiv(n_rows, min_grid_steps), 8)))
    # bf16-friendly sublane rounding.
    tn = (tn // 16) * 16 if tn >= 16 else 8
    tn = min(tn, _round_up(n_rows, 8))
    return max(tn, 8)


def time_feature_embedding_forward(x, weight, *, compute_dtype=jnp.bfloat16):
    """TimeFeatureEmbedding forward.

    x:      (..., d_inp)
    weight: (d_model, d_inp)   -- PyTorch nn.Linear convention, bias=False
    returns (..., d_model)      (in compute_dtype; bf16 halves the HBM byte stream)
    """
    *lead, d_inp = x.shape
    d_model, d_inp_w = weight.shape
    assert d_inp == d_inp_w, (d_inp, d_inp_w)

    n_rows = math.prod(lead) if lead else 1
    x2 = x.reshape(n_rows, d_inp)
    w_t = jnp.asarray(weight, jnp.float32).T              # (d_inp, d_model)

    # Lane-dense output for small d_model: fold g rows per slab row; block-diagonal
    # weight makes the kernel output width g*d_model = 128 (unmasked stores).
    g = 1
    if d_model < 128 and 128 % d_model == 0 and n_rows % (128 // d_model) == 0:
        g = 128 // d_model

    if g > 1:
        x_k = x2.reshape(n_rows // g, g * d_inp)
        w_k = jnp.kron(jnp.eye(g, dtype=jnp.float32), w_t)   # (g*d_inp, g*d_model)
    else:
        x_k, w_k = x2, w_t

    x_k = x_k.astype(compute_dtype)
    w_k = w_k.astype(compute_dtype)

    nk, xw = x_k.shape
    ow = w_k.shape[1]
    itemsize = jnp.dtype(compute_dtype).itemsize
    tn = _choose_row_tile(nk, xw, ow, itemsize)

    # Ragged last block: Pallas masks out-of-bounds output writes, so no pad/slice pass.
    grid = (pl.cdiv(nk, tn),)

    out = pl.pallas_call(
        _tfe_kernel,
        out_shape=jax.ShapeDtypeStruct((nk, ow), compute_dtype),
        grid_spec=pltpu.PrefetchScalarGridSpec(
            num_scalar_prefetch=0,
            grid=grid,
            in_specs=[
                # stream row tiles of x
                pl.BlockSpec((tn, xw), lambda i: (i, 0)),
                # weight: same block every step -> stays resident in VMEM
                pl.BlockSpec((xw, ow), lambda i: (0, 0)),
            ],
            out_specs=pl.BlockSpec((tn, ow), lambda i: (i, 0)),
        ),
        compiler_params=pltpu.CompilerParams(
            dimension_semantics=("parallel",),   # N-rows axis: megacore / 2-TC sharding
            vmem_limit_bytes=32 << 20,           # raise v5e's 16 MiB scoped default
        ),
    )(x_k, w_k)

    return out.reshape(*lead, d_model)


# ---------------------------------------------------------------------------
# Parameter init (mirrors nn.Linear default init, bias=False)
# ---------------------------------------------------------------------------
def init_time_feature_embedding(key, d_model, freq="h"):
    freq_map = {"h": 4, "t": 5, "s": 6, "m": 1, "a": 1, "w": 2, "d": 3, "b": 3}
    d_inp = freq_map[freq]
    bound = 1.0 / math.sqrt(d_inp)
    weight = jax.random.uniform(key, (d_model, d_inp), jnp.float32, -bound, bound)
    return weight


# ---------------------------------------------------------------------------
# Pure-JAX reference (for correctness check)
# ---------------------------------------------------------------------------
def _tfe_ref(x, weight):
    return jnp.einsum("...d,md->...m", x, weight)


if __name__ == "__main__":
    key = jax.random.PRNGKey(0)
    kx, kw = jax.random.split(key)

    # Small shapes consistent with the module: time-feature marks for freq='h'
    # -> d_inp = 4;  (batch, seq_len, d_inp) -> (batch, seq_len, d_model)
    B, L, d_model, freq = 2, 16, 32, "h"
    d_inp = 4

    x = jax.random.normal(kx, (B, L, d_inp), jnp.float32)
    weight = init_time_feature_embedding(kw, d_model, freq)

    out = time_feature_embedding_forward(x, weight)
    out = jax.block_until_ready(out)

    ref = _tfe_ref(x, weight)
    assert out.shape == (B, L, d_model), out.shape
    # bf16 I/O (f32 accumulation) -> loosened tolerance vs the f32 reference.
    assert jnp.allclose(out.astype(jnp.float32), ref, atol=2e-2, rtol=2e-2), \
        "mismatch vs JAX reference"

    print("KERNEL_OK")
</pallas_src>

<mosaic_0001>
module attributes {stable_mosaic.version = 11 : i64} {
  func.func @_tfe_kernel(%arg0: i32, %arg1: memref<8x16xbf16, #tpu.memory_space<vmem>>, %arg2: memref<16x128xbf16, #tpu.memory_space<vmem>>, %arg3: memref<8x128xbf16, #tpu.memory_space<vmem>>) attributes {dimension_semantics = [#tpu.dimension_semantics<parallel>], iteration_bounds = array<i64: 1>, scalar_prefetch = 0 : i64, scratch_operands = 0 : i64, tpu.core_type = #tpu.core_type<tc>, window_params = [{transform_indices = @transform_0, window_bounds = array<i64: 8, 16>}, {pipeline_mode = #tpu.pipeline_mode<synchronous>, transform_indices = @transform_1, window_bounds = array<i64: 16, 128>}, {transform_indices = @transform_2, window_bounds = array<i64: 8, 128>}]} {
    %c0 = arith.constant 0 : index
    %c0_0 = arith.constant 0 : index
    %0 = vector.load %arg1[%c0, %c0_0] : memref<8x16xbf16, #tpu.memory_space<vmem>>, vector<8x16xbf16>
    %c0_1 = arith.constant 0 : index
    %c0_2 = arith.constant 0 : index
    %1 = vector.load %arg2[%c0_1, %c0_2] : memref<16x128xbf16, #tpu.memory_space<vmem>>, vector<16x128xbf16>
    %cst = arith.constant dense<0.000000e+00> : vector<8x128xf32>
    %2 = tpu.matmul %0, %1, %cst {dimension_numbers = #tpu.dot_dimension_numbers<[1], [0], [0], [1], [0, 0, 1, 1], [], []>} : vector<8x16xbf16>, vector<16x128xbf16>, vector<8x128xf32> -> vector<8x128xf32>
    %3 = arith.truncf %2 : vector<8x128xf32> to vector<8x128xbf16>
    %c0_3 = arith.constant 0 : index
    %c0_4 = arith.constant 0 : index
    %4 = vector.load %arg3[%c0_3, %c0_4] : memref<8x128xbf16, #tpu.memory_space<vmem>>, vector<8x128xbf16>
    tpu.vector_store %arg3[%c0_3, %c0_4], %3 {strides = array<i32>} : memref<8x128xbf16, #tpu.memory_space<vmem>>, vector<8x128xbf16>,
    return
  }
  func.func @transform_0(%arg0: i32) -> (i32, i32) {
    %c0_i32 = arith.constant 0 : i32
    %c0_i32_0 = arith.constant 0 : i32
    return %arg0, %c0_i32 : i32, i32
  }
  func.func @transform_1(%arg0: i32) -> (i32, i32) {
    %c0_i32 = arith.constant 0 : i32
    %c0_i32_0 = arith.constant 0 : i32
    %c0_i32_1 = arith.constant 0 : i32
    return %c0_i32, %c0_i32_0 : i32, i32
  }
  func.func @transform_2(%arg0: i32) -> (i32, i32) {
    %c0_i32 = arith.constant 0 : i32
    %c0_i32_0 = arith.constant 0 : i32
    return %arg0, %c0_i32 : i32, i32
  }
}

</mosaic_0001>

<llo_original>
// kernel: tpu_custom_call.1
$region0: #{tpu_custom_call.1}
  #allocation0 [shape = 'u32[]', space=smem, size = 0x4, offset = 0x4, fixed_abs, tag = 'smem constant byte address 0x4 - core index']
  #allocation1 [shape = 'u32[72,128]{1,0:T(1,128)}', space=vmem, size = 0x9000, scoped, tag = 'internal scratch']
  %s0 = inlined_call_operand.hbm [shape: bf16[8,16], index: 0, kind: input, shape index: {}]
  %s1 = inlined_call_operand.hbm [shape: bf16[16,128], index: 1, kind: input, shape index: {}]
  %s2 = inlined_call_operand.hbm [shape: bf16[8,128], index: 2, kind: output, shape index: {}]
  %s3 = sld [smem:[#allocation0]]
  $region26: #{tpu_custom_call.1} parent=0
    _
  %s5 = ssub.s32 1, %s3
  %s6 = scalar_select 0, %s5, %s3
  $region1: #{tpu_custom_call.1} parent=0
    #allocation2 [shape = 'u8[2048]{0}', space=vmem, size = 0x800, scoped, tag = 'input window, operand 0, single buffered']
    #allocation3 [shape = 's32[1]{0}', space=sflag, size = 0x4, scoped, tag = 'scoped memory for tpu_custom_call.1']
    #allocation4 [shape = 's32[1]{0}', space=sflag, size = 0x4, scoped, tag = 'scoped memory for tpu_custom_call.1']
    #allocation5 [shape = 'u8[4096]{0}', space=vmem, size = 0x1000, scoped, tag = 'input window, operand 1, single buffered']
    #allocation6 [shape = 's32[1]{0}', space=sflag, size = 0x4, scoped, tag = 'scoped memory for tpu_custom_call.1']
    #allocation7 [shape = 'u8[2048]{0}', space=vmem, size = 0x800, scoped, tag = 'output window, operand 0, single buffered']
    %7 = vsyncpa [#allocation3], 0
    %8 = vsyncpa [#allocation6], 0
    %9 = vsyncpa [#allocation4], 0
    // Predicated region
    $region2: #{tpu_custom_call.1} parent=1 // pred_check
      _
    $region3: #{tpu_custom_call.1} parent=1 // pred_check_branch
      %11 = sbr.rel (0) target = $region5
    $region4: #{tpu_custom_call.1} parent=1 // pred_region
      %13 = vsyncadd [#allocation3], 0
      %s15 = sshll.u32 %s0, 4
      %s16 = int_to_ptr.hbm [resolvable:$true] %s15
      %s17 = sshll.u32 [#allocation2], 4
      %s18 = int_to_ptr.vmem [resolvable:$true] %s17
      %20 = dma.hbm_to_vmem [thread:$0]  %s16, 64, %s18, [#allocation3]
    $region5: #{tpu_custom_call.1} parent=1 // pred_fallthru
      _
    // Predicated region
    $region6: #{tpu_custom_call.1} parent=1 // pred_check
      _
    $region7: #{tpu_custom_call.1} parent=1 // pred_check_branch
      %22 = sbr.rel (0) target = $region9
    $region8: #{tpu_custom_call.1} parent=1 // pred_region
      %24 = vsyncadd [#allocation6], 0
      %s25 = sshll.u32 %s1, 4
      %s26 = int_to_ptr.hbm [resolvable:$true] %s25
      %s27 = sshll.u32 [#allocation5], 4
      %s28 = int_to_ptr.vmem [resolvable:$true] %s27
      %33 = dma.hbm_to_vmem [thread:$0]  %s26, 128, %s28, [#allocation6], 64, 64, 4
    $region9: #{tpu_custom_call.1} parent=1 // pred_fallthru
      _
    // Predicated region
    $region10: #{tpu_custom_call.1} parent=1 // pred_check
      _
    $region11: #{tpu_custom_call.1} parent=1 // pred_check_branch
      %35 = sbr.rel (0) target = $region13
    $region12: #{tpu_custom_call.1} parent=1 // pred_region
      %37 = dma.done [#allocation3], 64
    $region13: #{tpu_custom_call.1} parent=1 // pred_fallthru
      _
    // Predicated region
    $region14: #{tpu_custom_call.1} parent=1 // pred_check
      _
    $region15: #{tpu_custom_call.1} parent=1 // pred_check_branch
      %39 = sbr.rel (0) target = $region17
    $region16: #{tpu_custom_call.1} parent=1 // pred_region
      %41 = dma.done [#allocation6], 128
    $region17: #{tpu_custom_call.1} parent=1 // pred_fallthru
      _
    %v43 = vld [vmem:[#allocation2] sm:$0xf]
    %v44 = vld [vmem:[#allocation5] sm:$0xf]
    %v45 = vld [vmem:[#allocation5 + $0x4] sm:$0xf]
    %v48 = vunpack.c.l.b16 %v44
    %v49 = vunpack.c.l.b16 %v45
    %v50 = vpack.c.b16 %v49, %v48
    %vm52 = vcmask 130048
    %v54 = vsel %vm52, %v43, 0
    %56 = vmatpush.bf16.msra.mxu0 0
    %57 = vmatpush.bf16.msra.mxu0 0
    %58 = vmatpush.bf16.msra.mxu0 0
    %59 = vmatpush.bf16.msra.mxu0 0
    %60 = vmatpush.bf16.msra.mxu0 0
    %61 = vmatpush.bf16.msra.mxu0 0
    %62 = vmatpush.bf16.msra.mxu0 0
    %63 = vmatpush.bf16.msra.mxu0 %v50
    %64 = vmatmul.bf16.gmra.mxu0 %v54
    %v65 = vpop.f32.mrf.mxu0
    %v66 = vadd.f32 0.0, %v65
    %v67 = vpop.f32.mrf.mxu0
    %68 = vdwg.mxu0
    %v69 = vpack.c.bf16 %v66, %v66
    %70 = vst [vmem:[#allocation7] sm:$0xf] %v69
    // Predicated region
    $region18: #{tpu_custom_call.1} parent=1 // pred_check
      _
    $region19: #{tpu_custom_call.1} parent=1 // pred_check_branch
      %72 = sbr.rel (0) target = $region21
    $region20: #{tpu_custom_call.1} parent=1 // pred_region
      %74 = vsyncadd [#allocation4], 0
      %s76 = sshll.u32 [#allocation7], 4
      %s77 = int_to_ptr.vmem [resolvable:$true] %s76
      %s78 = sshll.u32 %s2, 4
      %s79 = int_to_ptr.hbm [resolvable:$true] %s78
      %81 = dma.vmem_to_hbm [thread:$0]  %s77, 64, %s79, [#allocation4]
    $region21: #{tpu_custom_call.1} parent=1 // pred_fallthru
      _
    // Predicated region
    $region22: #{tpu_custom_call.1} parent=1 // pred_check
      _
    $region23: #{tpu_custom_call.1} parent=1 // pred_check_branch
      %83 = sbr.rel (0) target = $region25
    $region24: #{tpu_custom_call.1} parent=1 // pred_region
      %85 = dma.done [#allocation4], 64
    $region25: #{tpu_custom_call.1} parent=1 // pred_fallthru
      _
    %86 = vsyncpa [#allocation3], 1
    %87 = vsyncpa [#allocation6], 1
    %88 = vsyncpa [#allocation4], 1

</llo_original>
